<compile_context>
chip_gen: v7x
topology: tpu7x:2x2x1
jax: 0.10.0
libtpu: 0.0.40
codegen_flags: <defaults>
</compile_context>

<pallas_src>
import functools
import math

import jax
import jax.numpy as jnp
from jax import lax
from jax.experimental import pallas as pl
from jax.experimental.pallas import tpu as pltpu


def _vsum_kernel(v_ref, wmap_ref, bmap_ref, vsum_ref):
  """vsum_e = value @ (Wv @ head_map) + bv @ head_map  (per-head channel sums)."""
  vsum_ref[...] = (jnp.dot(v_ref[...], wmap_ref[...],
                           preferred_element_type=jnp.float32) + bmap_ref[...])


def _deform_xattn_kernel(bounds_ref, q_ref, k_ref, v_ref, vsum_ref,
                         wref_ref, woff_ref, brefoff_ref, hmap_ref,
                         esel_ref, wvt_ref, bvt_ref, wout_ref, bout_ref,
                         out_ref, *, num_heads, n_points):
  f32, bf16 = jnp.float32, jnp.bfloat16
  H, P = num_heads, n_points
  HP = H * P

  q = q_ref[...]                                   # [TN, C] f32
  k = k_ref[...]                                   # [TN, C] f32
  TN, C = q.shape
  Cph = C // H
  M = vsum_ref.shape[0]

  # ---- sampling-location projections (kept f32: they drive floor()/compares) ----
  ref_x = jax.nn.sigmoid(
      jnp.dot(q, wref_ref[...], preferred_element_type=f32) + brefoff_ref[0:1, :])
  off_x = jnp.dot(q, woff_ref[...], preferred_element_type=f32) + brefoff_ref[1:2, :]
  x = (ref_x + off_x) * float(M - 1)               # [TN, HP]
  x0f = jnp.clip(jnp.floor(x), 0.0, float(M - 1))
  x0i = x0f.astype(jnp.int32)                      # int compare (safe for any M)
  wx = x - x0f                                     # torch: x - clamp(floor(x))

  # ---- bounded gather-as-select over vsum_e rows (bounds from scalar prefetch) ----
  i = pl.program_id(0)
  lo = bounds_ref[i, 0]
  hi = bounds_ref[i, 1]
  zeros = jnp.zeros((TN, HP), f32)

  def gather_body(m, carry):
    g0, g1 = carry
    mask = x0i == m                                # one compare serves x0 and x1
    g0 = g0 + jnp.where(mask, vsum_ref[pl.ds(m, 1), :], 0.0)
    g1 = g1 + jnp.where(mask, vsum_ref[pl.ds(jnp.minimum(m + 1, M - 1), 1), :], 0.0)
    return g0, g1

  vg0, vg1 = lax.fori_loop(lo, hi + 1, gather_body, (zeros, zeros))
  # x < 0 edge: reference clamps x1 to 0 (not x0 + 1).
  vg1 = jnp.where(x < 0.0, vsum_ref[0:1, :], vg1)

  # y-weights cancel exactly -> the 4-term bilinear expression reduces to (1-wx)/wx.
  t = (1.0 - wx) * vg0 + wx * vg1                  # [TN, HP]

  # TODO(synk): _compute_attention_weights is undefined in the reference module;
  # keeping the documented guess: sigmoid of the per-head scaled q.k dot product.
  qk = jnp.dot(((q * k) * (1.0 / math.sqrt(Cph))).astype(bf16), hmap_ref[...],
               preferred_element_type=f32)         # [TN, HP] (constant across points)
  s = jax.nn.sigmoid(qk) * t                       # [TN, HP]

  # einsum('nhmp,nhc->nmc').reshape(N, C) via per-head 0/1 selector matmuls (MXU):
  #   pre[n, p*Cph + c] = sum_h s[n, h*P+p] * value_proj[n, h*Cph+c]
  # value_proj is folded into the tiled weights wvt/bvt (no vproj intermediate).
  s_bf = s.astype(bf16)
  v_bf = v_ref[...]                                # [TN, C] bf16 value rows (M == N)
  pre = jnp.zeros((TN, C), f32)
  for h in range(H):                               # H is small and static
    se = jnp.dot(s_bf, esel_ref[h], preferred_element_type=f32)        # s expanded
    vt = jnp.dot(v_bf, wvt_ref[h], preferred_element_type=f32) + bvt_ref[h]
    pre = pre + se * vt

  out_ref[...] = (jnp.dot(pre.astype(bf16), wout_ref[...],
                          preferred_element_type=f32) + bout_ref[...])


def _pick_row_tile(n, cap=512):
  """Largest multiple-of-8 divisor of n <= cap; keeps >=2 grid steps when possible
  so dimension_semantics=("parallel",) can feed both v7x TensorCores."""
  if n % 8 != 0:
    return n                                       # single full-extent block
  limit = max(8, min(cap, n // 2 if n >= 16 else n))
  best = 8
  t = 8
  while t <= min(n, limit):
    if n % t == 0:
      best = t
    t += 8
  return best


def deformable_cross_attention(query, key, value, params, *, num_heads, n_points,
                               row_tile=None):
  f32, bf16 = jnp.float32, jnp.bfloat16
  N, C = query.shape
  M, _ = key.shape
  assert value.shape[0] == M
  assert M == N, "reference einsum shares label 'n' between query and value rows"
  H, P = num_heads, n_points
  Cph = C // H
  assert P * Cph == C, "reference reshape(N, C) requires n_points == num_heads"
  HP = H * P

  tn = row_tile if row_tile is not None else _pick_row_tile(N)
  tm = row_tile if row_tile is not None else _pick_row_tile(M)
  assert N % tn == 0 and (tn % 8 == 0 or tn == N)
  assert M % tm == 0 and (tm % 8 == 0 or tm == M)

  # ---- weight prep (de-interleave x columns; y branch is analytically dead) ----
  wref_x = params["w_ref"][:, 0::2].astype(f32)    # [C, HP]
  bref_x = params["b_ref"][0::2].astype(f32)       # [HP]
  woff_x = params["w_off"][:, 0::2].astype(f32)
  boff_x = params["b_off"][0::2].astype(f32)
  brefoff = jnp.stack([bref_x, boff_x])            # [2, HP]

  cols = jnp.arange(C)
  hp_rows = jnp.arange(HP)
  # head_map[c, h*P+p] = 1 iff channel c belongs to head h (head-sum + point-expand)
  head_map = ((cols[:, None] // Cph) == (hp_rows[None, :] // P)).astype(f32)   # [C, HP]

  w_v = params["w_v"].astype(f32)
  b_v = params["b_v"].astype(f32)
  # stage-1 folded weights: vsum_e = value @ (Wv @ head_map) + bv @ head_map
  wv_map = (w_v @ head_map).astype(bf16)           # [C, HP]
  bv_map = (b_v @ head_map)[None, :]               # [1, HP] f32

  # per-head selectors for the einsum/reshape (output column j = p*Cph + c)
  p_of_col = cols // Cph
  c_of_col = cols % Cph
  point_match = (hp_rows[:, None] % P) == p_of_col[None, :]
  head_of_row = hp_rows // P
  e_sel = jnp.stack([(point_match & (head_of_row[:, None] == h)).astype(f32)
                     for h in range(H)]).astype(bf16)                   # [H, HP, C]
  # value_proj folded into value: vt_h = value @ wvt[h] + bvt[h]
  wvt = jnp.stack([w_v[:, h * Cph + c_of_col] for h in range(H)]).astype(bf16)  # [H, C, C]
  bvt = jnp.stack([b_v[h * Cph + c_of_col] for h in range(H)])[:, None, :]      # [H, 1, C]

  wout = params["w_out"].astype(bf16)
  bout = params["b_out"][None, :].astype(f32)
  head_map_bf = head_map.astype(bf16)
  value_bf = value.astype(bf16)                    # MXU-only operand: halve DMA bytes

  # ---- per-tile gather bounds (scalar prefetch; bounded gather scan) ----
  # Cheap wrapper-side duplicate of the location projection; padded by +/-2 rows
  # to absorb EUP-sigmoid / MXU-f32 ulp differences vs the in-kernel computation.
  g2 = N // tn
  q32 = query.astype(f32)
  x_all = (jax.nn.sigmoid(q32 @ wref_x + bref_x) + q32 @ woff_x + boff_x) * (M - 1)
  x0_all = jnp.clip(jnp.floor(x_all), 0.0, float(M - 1)).astype(jnp.int32)  # [N, HP]
  x0_t = x0_all.reshape(g2, tn * HP)
  lo = jnp.clip(jnp.min(x0_t, axis=1) - 2, 0, M - 1)
  hi = jnp.clip(jnp.max(x0_t, axis=1) + 2, 0, M - 1)
  bounds = jnp.stack([lo, hi], axis=1).astype(jnp.int32)                    # [g2, 2]

  cparams = pltpu.CompilerParams(
      dimension_semantics=("parallel",),           # megacore split on v7x
      vmem_limit_bytes=32 * 1024 * 1024)           # safe on v5e/v6e/v7x (64 MiB phys)

  # ---- stage 1: per-head channel sums of value_proj; only [M, HP] hits HBM ----
  ce1 = pl.CostEstimate(
      flops=2 * M * C * HP, transcendentals=0,
      bytes_accessed=M * C * 2 + C * HP * 2 + HP * 4 + M * HP * 4)
  vsum_e = pl.pallas_call(
      _vsum_kernel,
      grid=(M // tm,),
      in_specs=[pl.BlockSpec((tm, C), lambda i: (i, 0)),      # value rows (bf16)
                pl.BlockSpec((C, HP), lambda i: (0, 0)),      # Wv @ head_map (bf16)
                pl.BlockSpec((1, HP), lambda i: (0, 0))],     # bv @ head_map
      out_specs=pl.BlockSpec((tm, HP), lambda i: (i, 0)),
      out_shape=jax.ShapeDtypeStruct((M, HP), f32),
      compiler_params=cparams,
      cost_estimate=ce1,
  )(value_bf, wv_map, bv_map)

  # ---- stage 2: main kernel, row-tiled over N; weights + vsum_e resident ----
  flops2 = 2 * N * C * HP * 3 + 2 * N * H * (HP * C + C * C) + 2 * N * C * C
  bytes2 = (3 * N * C * 4 + N * C * 2 + M * HP * 4
            + (2 * C * HP + 2 * HP + H * C + C) * 4
            + (C * HP + H * HP * C + H * C * C + C * C) * 2)
  ce2 = pl.CostEstimate(flops=flops2, transcendentals=2 * N * HP,
                        bytes_accessed=bytes2)

  kernel = functools.partial(_deform_xattn_kernel, num_heads=H, n_points=P)
  out = pl.pallas_call(
      kernel,
      grid_spec=pltpu.PrefetchScalarGridSpec(
          num_scalar_prefetch=1,                   # per-tile gather bounds (SMEM)
          grid=(g2,),
          in_specs=[
              pl.BlockSpec((tn, C), lambda i, b: (i, 0)),        # q rows (f32)
              pl.BlockSpec((tn, C), lambda i, b: (i, 0)),        # k rows (f32)
              pl.BlockSpec((tn, C), lambda i, b: (i, 0)),        # value rows (bf16, M==N)
              pl.BlockSpec((M, HP), lambda i, b: (0, 0)),        # vsum_e (resident gather src)
              pl.BlockSpec((C, HP), lambda i, b: (0, 0)),        # wref_x (f32)
              pl.BlockSpec((C, HP), lambda i, b: (0, 0)),        # woff_x (f32)
              pl.BlockSpec((2, HP), lambda i, b: (0, 0)),        # [bref_x; boff_x]
              pl.BlockSpec((C, HP), lambda i, b: (0, 0)),        # head_map (bf16)
              pl.BlockSpec((H, HP, C), lambda i, b: (0, 0, 0)),  # point/head expanders
              pl.BlockSpec((H, C, C), lambda i, b: (0, 0, 0)),   # Wv cols tiled per head
              pl.BlockSpec((H, 1, C), lambda i, b: (0, 0, 0)),   # bv cols tiled per head
              pl.BlockSpec((C, C), lambda i, b: (0, 0)),         # Wout (bf16)
              pl.BlockSpec((1, C), lambda i, b: (0, 0)),         # bout
          ],
          out_specs=pl.BlockSpec((tn, C), lambda i, b: (i, 0)),
      ),
      out_shape=jax.ShapeDtypeStruct((N, C), f32),
      compiler_params=cparams,
      cost_estimate=ce2,
  )(bounds, query.astype(f32), key.astype(f32), value_bf, vsum_e,
    wref_x, woff_x, brefoff, head_map_bf, e_sel, wvt, bvt, wout, bout)
  return out


def _init_params(rng, dim, num_heads, n_points):
  HP2 = 2 * num_heads * n_points
  k = jax.random.split(rng, 6)
  xav = math.sqrt(6.0 / (dim + HP2))               # xavier_uniform bound
  u = 1.0 / math.sqrt(dim)                         # torch default Linear bound
  return {
      "w_ref": jax.random.uniform(k[0], (dim, HP2), jnp.float32, -xav, xav),
      "b_ref": jnp.zeros((HP2,), jnp.float32),
      "w_off": jax.random.uniform(k[1], (dim, HP2), jnp.float32, -xav, xav),
      "b_off": jnp.zeros((HP2,), jnp.float32),
      "w_v": jax.random.uniform(k[2], (dim, dim), jnp.float32, -u, u),
      "b_v": jax.random.uniform(k[3], (dim,), jnp.float32, -u, u),
      "w_out": jax.random.uniform(k[4], (dim, dim), jnp.float32, -u, u),
      "b_out": jax.random.uniform(k[5], (dim,), jnp.float32, -u, u),
  }


if __name__ == "__main__":
  dim, num_heads, n_points = 32, 4, 4              # n_points == num_heads (reference reshape)
  N = M = 16                                       # M == N (reference einsum)

  root = jax.random.PRNGKey(0)
  kq, kk, kv, kp = jax.random.split(root, 4)
  query = jax.random.normal(kq, (N, dim), jnp.float32)
  key = jax.random.normal(kk, (M, dim), jnp.float32)
  value = jax.random.normal(kv, (M, dim), jnp.float32)
  params = _init_params(kp, dim, num_heads, n_points)

  # default tiling: 8-row tiles -> 2 grid steps, exercising the pipelined path
  out = deformable_cross_attention(query, key, value, params,
                                   num_heads=num_heads, n_points=n_points)
  out = jax.block_until_ready(out)
  assert out.shape == (N, dim) and bool(jnp.all(jnp.isfinite(out)))
  print("KERNEL_OK")
</pallas_src>

<mosaic_0001>
module attributes {stable_mosaic.version = 11 : i64} {
  func.func @_vsum_kernel(%arg0: i32, %arg1: memref<8x32xbf16, #tpu.memory_space<vmem>>, %arg2: memref<32x16xbf16, #tpu.memory_space<vmem>>, %arg3: memref<1x16xf32, #tpu.memory_space<vmem>>, %arg4: memref<8x16xf32, #tpu.memory_space<vmem>>) attributes {dimension_semantics = [#tpu.dimension_semantics<parallel>], iteration_bounds = array<i64: 2>, scalar_prefetch = 0 : i64, scratch_operands = 0 : i64, tpu.core_type = #tpu.core_type<tc>, window_params = [{transform_indices = @transform_0, window_bounds = array<i64: 8, 32>}, {pipeline_mode = #tpu.pipeline_mode<synchronous>, transform_indices = @transform_1, window_bounds = array<i64: 32, 16>}, {pipeline_mode = #tpu.pipeline_mode<synchronous>, transform_indices = @transform_2, window_bounds = array<i64: 1, 16>}, {transform_indices = @transform_3, window_bounds = array<i64: 8, 16>}]} {
    %c0 = arith.constant 0 : index
    %c0_0 = arith.constant 0 : index
    %0 = vector.load %arg1[%c0, %c0_0] : memref<8x32xbf16, #tpu.memory_space<vmem>>, vector<8x32xbf16>
    %c0_1 = arith.constant 0 : index
    %c0_2 = arith.constant 0 : index
    %1 = vector.load %arg2[%c0_1, %c0_2] : memref<32x16xbf16, #tpu.memory_space<vmem>>, vector<32x16xbf16>
    %cst = arith.constant dense<0.000000e+00> : vector<8x16xf32>
    %2 = tpu.matmul %0, %1, %cst {dimension_numbers = #tpu.dot_dimension_numbers<[1], [0], [0], [1], [0, 0, 1, 1], [], []>} : vector<8x32xbf16>, vector<32x16xbf16>, vector<8x16xf32> -> vector<8x16xf32>
    %c0_3 = arith.constant 0 : index
    %c0_4 = arith.constant 0 : index
    %3 = vector.load %arg3[%c0_3, %c0_4] : memref<1x16xf32, #tpu.memory_space<vmem>>, vector<1x16xf32>
    %4 = vector.broadcast %3 : vector<1x16xf32> to vector<8x16xf32>
    %5 = arith.addf %2, %4 : vector<8x16xf32>
    %c0_5 = arith.constant 0 : index
    %c0_6 = arith.constant 0 : index
    %6 = vector.load %arg4[%c0_5, %c0_6] : memref<8x16xf32, #tpu.memory_space<vmem>>, vector<8x16xf32>
    tpu.vector_store %arg4[%c0_5, %c0_6], %5 {strides = array<i32>} : memref<8x16xf32, #tpu.memory_space<vmem>>, vector<8x16xf32>,
    return
  }
  func.func @transform_0(%arg0: i32) -> (i32, i32) {
    %c0_i32 = arith.constant 0 : i32
    %c0_i32_0 = arith.constant 0 : i32
    return %arg0, %c0_i32 : i32, i32
  }
  func.func @transform_1(%arg0: i32) -> (i32, i32) {
    %c0_i32 = arith.constant 0 : i32
    %c0_i32_0 = arith.constant 0 : i32
    %c0_i32_1 = arith.constant 0 : i32
    return %c0_i32, %c0_i32_0 : i32, i32
  }
  func.func @transform_2(%arg0: i32) -> (i32, i32) {
    %c0_i32 = arith.constant 0 : i32
    %c0_i32_0 = arith.constant 0 : i32
    %c0_i32_1 = arith.constant 0 : i32
    return %c0_i32, %c0_i32_0 : i32, i32
  }
  func.func @transform_3(%arg0: i32) -> (i32, i32) {
    %c0_i32 = arith.constant 0 : i32
    %c0_i32_0 = arith.constant 0 : i32
    return %arg0, %c0_i32 : i32, i32
  }
}

</mosaic_0001>

<llo_original>
// kernel: tpu_custom_call.1
$region0: #{tpu_custom_call.1}
  #allocation0 [shape = 'u32[]', space=smem, size = 0x4, offset = 0x4, fixed_abs, tag = 'smem constant byte address 0x4 - core index']
  #allocation1 [shape = 'u32[144,128]{1,0:T(1,128)}', space=vmem, size = 0x12000, scoped, tag = 'internal scratch']
  %s0 = inlined_call_operand.vmem [shape: bf16[16,32], index: 0, kind: input, shape index: {}]
  %s1 = inlined_call_operand.vmem [shape: bf16[32,16], index: 1, kind: input, shape index: {}]
  %s2 = inlined_call_operand.vmem [shape: f32[1,16], index: 2, kind: input, shape index: {}]
  %s3 = inlined_call_operand.hbm [shape: f32[16,16], index: 3, kind: output, shape index: {}]
  %s4 = sld [smem:[#allocation0]]
  $region45: #{tpu_custom_call.1} parent=0
    _
  %s6 = ssub.s32 1, %s4
  %s7 = scalar_select 0, %s6, %s4
  $region1: #{tpu_custom_call.1} parent=0
    #allocation2 [shape = 'u8[8192]{0}', space=vmem, size = 0x2000, scoped, tag = 'output window, operand 0']
    #allocation3 [shape = 's32[2]{0}', space=sflag, size = 0x8, scoped, tag = 'scoped memory for tpu_custom_call.1']
    %8 = vsyncpa [#allocation3], 0
    %s9 = scalar_lea.sflag [#allocation3], 1
    %10 = vsyncpa %s9, 0
    loop: start=0, step=1, limit=4
    $region2: #{tpu_custom_call.1} parent=1 // loop_pre_header
      _
    $region3: #{tpu_custom_call.1} parent=1 // loop_header
      %s12 = sphi 0, %s16
      %p13 = scmp.ge.s32.totalorder %s12, 4
      %s22 = sphi 0, %s24
      %s25 = sphi 0, %s22
      %s26 = sphi 0, %s25
      %s42 = sphi 0, %s26
      %s46 = sphi 0, %s46
      %s48 = sphi 0, %s46
      %s49 = sphi 0, %s48
      %s63 = sphi 0, %s49
      %s67 = sphi 0, %s67
      %s69 = sphi 0, %s67
      %s70 = sphi 0, %s69
      %s84 = sphi 0, %s70
      %s90 = sphi 0, %s92
      %s93 = sphi 0, %s90
      %s94 = sphi 0, %s93
      %s110 = sphi 0, %s94
    $region4: #{tpu_custom_call.1} parent=1 // loop_header_branch
      %15 = sbr.rel (%p13) target = $region8
    $region5: #{tpu_custom_call.1} parent=1 // loop_body
      %s17 = ssub.s32 %s12, 1
      %s18 = ssub.s32 %s12, 2
      %s19 = sadd.s32 %s12, 1
      %s20 = ssub.s32 %s12, %s19
      %p21 = scmp.eq.s32.totalorder %s20, 0
      %s23 = sadd.s32 %s22, 1
      %s24 = scalar_select %p21, %s22, %s23
      %p27 = pneg %p21
      %p28 = scmp.eq.s32.totalorder %s12, 1
      %p29 = por %p27, %p28
      %p30 = scmp.ne.s32.totalorder %s22, %s25
      %p31 = scmp.eq.s32.totalorder %s12, 0
      %p32 = por %p30, %p31
      %p33 = scmp.ne.s32.totalorder %s22, %s25
      %p34 = scmp.eq.s32.totalorder %s17, 1
      %p35 = por %p33, %p34
      %p36 = scmp.ne.s32.totalorder %s25, %s26
      %p37 = scmp.eq.s32.totalorder %s17, 0
      %p38 = por %p36, %p37
      %p39 = scmp.ne.s32.totalorder %s25, %s26
      %p40 = scmp.eq.s32.totalorder %s18, 1
      %p41 = por %p39, %p40
      %p43 = scmp.ne.s32.totalorder %s26, %s42
      %p44 = scmp.eq.s32.totalorder %s18, 0
      %p45 = por %p43, %p44
      %s47 = sadd.s32 %s46, 1
      %p50 = scmp.eq.s32.totalorder %s12, 1
      %p51 = scmp.ne.s32.totalorder %s46, %s48
      %p52 = scmp.eq.s32.totalorder %s12, 0
      %p53 = por %p51, %p52
      %p54 = scmp.ne.s32.totalorder %s46, %s48
      %p55 = scmp.eq.s32.totalorder %s17, 1
      %p56 = por %p54, %p55
      %p57 = scmp.ne.s32.totalorder %s48, %s49
      %p58 = scmp.eq.s32.totalorder %s17, 0
      %p59 = por %p57, %p58
      %p60 = scmp.ne.s32.totalorder %s48, %s49
      %p61 = scmp.eq.s32.totalorder %s18, 1
      %p62 = por %p60, %p61
      %p64 = scmp.ne.s32.totalorder %s49, %s63
      %p65 = scmp.eq.s32.totalorder %s18, 0
      %p66 = por %p64, %p65
      %s68 = sadd.s32 %s67, 1
      %p71 = scmp.eq.s32.totalorder %s12, 1
      %p72 = scmp.ne.s32.totalorder %s67, %s69
      %p73 = scmp.eq.s32.totalorder %s12, 0
      %p74 = por %p72, %p73
      %p75 = scmp.ne.s32.totalorder %s67, %s69
      %p76 = scmp.eq.s32.totalorder %s17, 1
      %p77 = por %p75, %p76
      %p78 = scmp.ne.s32.totalorder %s69, %s70
      %p79 = scmp.eq.s32.totalorder %s17, 0
      %p80 = por %p78, %p79
      %p81 = scmp.ne.s32.totalorder %s69, %s70
      %p82 = scmp.eq.s32.totalorder %s18, 1
      %p83 = por %p81, %p82
      %p85 = scmp.ne.s32.totalorder %s70, %s84
      %p86 = scmp.eq.s32.totalorder %s18, 0
      %p87 = por %p85, %p86
      %s88 = ssub.s32 %s12, %s19
      %p89 = scmp.eq.s32.totalorder %s88, 0
      %s91 = sadd.s32 %s90, 1
      %s92 = scalar_select %p89, %s90, %s91
      %p95 = pneg %p89
      %p96 = scmp.eq.s32.totalorder %s12, 1
      %p97 = por %p95, %p96
      %p98 = scmp.ne.s32.totalorder %s90, %s93
      %p99 = scmp.eq.s32.totalorder %s12, 0
      %p100 = por %p98, %p99
      %p101 = scmp.ne.s32.totalorder %s90, %s93
      %p102 = scmp.eq.s32.totalorder %s17, 1
      %p103 = por %p101, %p102
      %p104 = scmp.ne.s32.totalorder %s93, %s94
      %p105 = scmp.eq.s32.totalorder %s17, 0
      %p106 = por %p104, %p105
      %p107 = scmp.ne.s32.totalorder %s93, %s94
      %p108 = scmp.eq.s32.totalorder %s18, 1
      %p109 = por %p107, %p108
      %p111 = scmp.ne.s32.totalorder %s94, %s110
      %p112 = scmp.eq.s32.totalorder %s18, 0
      %p113 = por %p111, %p112
      %p114 = scmp.le.s32.totalorder 1, %s12
      %p115 = scmp.lt.s32.totalorder %s12, 3
      %p116 = pnand %p114, %p115
      %p117 = pneg %p116
      // Predicated region
      $region9: #{tpu_custom_call.1} parent=5 // pred_check
        _
      $region10: #{tpu_custom_call.1} parent=5 // pred_check_branch
        %119 = sbr.rel (%p116) target = $region12
      $region11: #{tpu_custom_call.1} parent=5 // pred_region
        %s120 = ssub.s32 %s12, 1
        // Predicated region
        $region13: #{tpu_custom_call.1} parent=11 // pred_check
          %p121 = pneg %p59
        $region14: #{tpu_custom_call.1} parent=11 // pred_check_branch
          %123 = sbr.rel (%p121) target = $region16
        $region15: #{tpu_custom_call.1} parent=11 // pred_region
          _
        $region16: #{tpu_custom_call.1} parent=11 // pred_fallthru
          _
        // Predicated region
        $region17: #{tpu_custom_call.1} parent=11 // pred_check
          %p124 = pneg %p80
        $region18: #{tpu_custom_call.1} parent=11 // pred_check_branch
          %126 = sbr.rel (%p124) target = $region20
        $region19: #{tpu_custom_call.1} parent=11 // pred_region
          _
        $region20: #{tpu_custom_call.1} parent=11 // pred_fallthru
          _
      $region12: #{tpu_custom_call.1} parent=5 // pred_fallthru
        _
      %p127 = scmp.lt.s32.totalorder %s12, 2
      // Predicated region
      $region21: #{tpu_custom_call.1} parent=5 // pred_check
        %p128 = pneg %p127
      $region22: #{tpu_custom_call.1} parent=5 // pred_check_branch
        %130 = sbr.rel (%p128) target = $region24
      $region23: #{tpu_custom_call.1} parent=5 // pred_region
        // Predicated region
        $region25: #{tpu_custom_call.1} parent=23 // pred_check
          %p131 = pneg %p32
        $region26: #{tpu_custom_call.1} parent=23 // pred_check_branch
          %133 = sbr.rel (%p131) target = $region28
        $region27: #{tpu_custom_call.1} parent=23 // pred_region
          %p134 = scmp.lt.s32.totalorder %s12, 1
          %s135 = scalar_select %p134, %s12, 1
          %s136 = smul.addr %s135, 4
          %s137 = scalar_lea.vmem %s0, %s136
        $region28: #{tpu_custom_call.1} parent=23 // pred_fallthru
          _
      $region24: #{tpu_custom_call.1} parent=5 // pred_fallthru
        _
      %p138 = scmp.le.s32.totalorder 1, %s12
      %p139 = scmp.lt.s32.totalorder %s12, 3
      %p140 = pnand %p138, %p139
      %p141 = pneg %p140
      // Predicated region
      $region29: #{tpu_custom_call.1} parent=5 // pred_check
        _
      $region30: #{tpu_custom_call.1} parent=5 // pred_check_branch
        %143 = sbr.rel (%p140) target = $region32
      $region31: #{tpu_custom_call.1} parent=5 // pred_region
        %s144 = ssub.s32 %s12, 1
        %p145 = scmp.lt.s32.totalorder %s17, 1
        %s146 = scalar_select %p145, %s17, 1
        %s147 = smul.addr %s146, 4
        %s148 = scalar_lea.vmem %s0, %s147
        %p149 = pneg %p38
        %p150 = pneg %p35
        %p151 = pneg %p59
        %p152 = pneg %p56
        %p153 = pneg %p80
        %p154 = pneg %p77
        %p155 = pneg %p106
        %p156 = pneg %p103
        %s157 = sand.u32 %s93, 1
        %s158 = scalar_lea.sflag [#allocation3], %s157
        %s159 = sand.u32 %s93, 1
        %s160 = smul.addr %s159, 8
        %s161 = scalar_lea.vmem [#allocation2], %s160
        %p162 = scmp.lt.s32.totalorder %s17, 1
        %s163 = scalar_select %p162, %s17, 1
        %s164 = smul.addr %s163, 4
        %s165 = scalar_lea.vmem %s0, %s164
        %v167 = vld [vmem:[%s165] sm:$0xf]
        %v168 = vld [vmem:[%s1] sm:$0xf]
        %v169 = vld [vmem:[%s1 + $0x4] sm:$0xf]
        %v170 = vld [vmem:[%s1 + $0x8] sm:$0xf]
        %v171 = vld [vmem:[%s1 + $0xc] sm:$0xf]
        %v172 = vld [vmem:[%s2] sm:$0x1]
        %v174 = vlaneseq
        %v175 = vshrl.u32 %v174, 7
        %v176 = vsub.s32 0, %v175
        %v177 = vrot.slane %v172, %v176
        %v183 = vunpack.c.l.b16 %v168
        %v184 = vunpack.c.l.b16 %v169
        %v185 = vunpack.c.l.b16 %v170
        %v186 = vunpack.c.l.b16 %v171
        %v187 = vpack.c.b16 %v184, %v183
        %v188 = vpack.c.b16 %v186, %v185
        %vm191 = vcmask 261120
        %v193 = vsel %vm191, %v167, 0
        %195 = vmatprep.subr.bf16.mxu0 0
        %196 = vmatpush1.bf16.msra.mxu0 %v187
        %197 = vmatprep.subr.bf16.mxu0 0
        %198 = vmatpush1.bf16.msra.mxu0 %v188
        %199 = vmatprep.subr.bf16.mxu0 0
        %200 = vmatpush1.bf16.msra.mxu0 0
        %201 = vmatprep.subr.bf16.mxu0 0
        %202 = vmatpush1.bf16.msra.mxu0 0
        %203 = vmatprep.subr.bf16.mxu0 0
        %204 = vmatpush1.bf16.msra.mxu0 0
        %205 = vmatprep.subr.bf16.mxu0 0
        %206 = vmatpush1.bf16.msra.mxu0 0
        %207 = vmatprep.subr.bf16.mxu0 0
        %208 = vmatpush1.bf16.msra.mxu0 0
        %209 = vmatprep.subr.bf16.mxu0 0
        %210 = vmatpush1.bf16.msra.mxu0 0
        %211 = vmatprep.subr.bf16.mxu0 0
        %212 = vmatpush1.bf16.msra.mxu0 0
        %213 = vmatprep.subr.bf16.mxu0 0
        %214 = vmatpush1.bf16.msra.mxu0 0
        %215 = vmatprep.subr.bf16.mxu0 0
        %216 = vmatpush1.bf16.msra.mxu0 0
        %217 = vmatprep.subr.bf16.mxu0 0
        %218 = vmatpush1.bf16.msra.mxu0 0
        %219 = vmatprep.subr.bf16.mxu0 0
        %220 = vmatpush1.bf16.msra.mxu0 0
        %221 = vmatprep.subr.bf16.mxu0 0
        %222 = vmatpush1.bf16.msra.mxu0 0
        %223 = vmatprep.subr.bf16.mxu0 0
        %224 = vmatpush1.bf16.msra.mxu0 0
        %225 = vmatprep.subr.bf16.mxu0 0
        %226 = vmatpush1.bf16.msra.mxu0 0
        %227 = vmatprep.mubr.bf16.mxu0 0
        %228 = vmatmul.mubr.bf16.gmra.mrb[0].mxu0 %v193
        %v229 = vpop.f32.mrb[0].mxu0
        %v230 = vadd.f32 %v177, %v229
        %v231 = vpop.f32.mrb[0].mxu0
        %v232 = vpop.f32.mrb[0].mxu0
        %v233 = vpop.f32.mrb[0].mxu0
        %234 = vdwg.mxu0
        %vm235 = vcmask 130048
        %236 = vst.msk [vmem:[%s161] sm:$0xff] %vm235, %v230
        %s237 = sand.u32 %s93, 1
        %s238 = scalar_lea.sflag [#allocation3], %s237
        %s239 = sand.u32 %s93, 1
        %s240 = smul.addr %s239, 8
        %s241 = scalar_lea.vmem [#allocation2], %s240
        // Predicated region
        $region33: #{tpu_custom_call.1} parent=31 // pred_check
          %p242 = pneg %p103
        $region34: #{tpu_custom_call.1} parent=31 // pred_check_branch
          %244 = sbr.rel (%p242) target = $region36
        $region35: #{tpu_custom_call.1} parent=31 // pred_region
          %s246 = ssub.s32 128, 128
          %247 = vsyncadd %s238, %s246
          %s248 = smul.addr %s17, 128
          %s249 = scalar_lea.hbm %s3, %s248
          %s251 = sshll.u32 %s241, 4
          %s252 = int_to_ptr.vmem [resolvable:$true] %s251
          %254 = dma.vmem_to_hbm [thread:$0]  %s252, 128, %s249, %s238
        $region36: #{tpu_custom_call.1} parent=31 // pred_fallthru
          _
      $region32: #{tpu_custom_call.1} parent=5 // pred_fallthru
        _
      %p255 = scmp.le.s32.totalorder 2, %s12
      // Predicated region
      $region37: #{tpu_custom_call.1} parent=5 // pred_check
        %p256 = pneg %p255
      $region38: #{tpu_custom_call.1} parent=5 // pred_check_branch
        %258 = sbr.rel (%p256) target = $region40
      $region39: #{tpu_custom_call.1} parent=5 // pred_region
        %s259 = ssub.s32 %s12, 2
        // Predicated region
        $region41: #{tpu_custom_call.1} parent=39 // pred_check
          %p260 = pneg %p109
        $region42: #{tpu_custom_call.1} parent=39 // pred_check_branch
          %262 = sbr.rel (%p260) target = $region44
        $region43: #{tpu_custom_call.1} parent=39 // pred_region
          %s263 = sand.u32 %s94, 1
          %s264 = scalar_lea.sflag [#allocation3], %s263
          %s265 = sand.u32 %s94, 1
          %s266 = smul.addr %s265, 8
          %s267 = scalar_lea.vmem [#allocation2], %s266
          %268 = dma.done %s264, 128
        $region44: #{tpu_custom_call.1} parent=39 // pred_fallthru
          _
      $region40: #{tpu_custom_call.1} parent=5 // pred_fallthru
        _
    $region6: #{tpu_custom_call.1} parent=1 // loop_footer
      %s16 = sadd.s32 1, %s12
    $region7: #{tpu_custom_call.1} parent=1 // loop_footer_branch
      %11 = sbr.rel target = $region3
    $region8: #{tpu_custom_call.1} parent=1 // loop_exit
      _
    %269 = vsyncpa [#allocation3], 1
    %s270 = scalar_lea.sflag [#allocation3], 1
    %271 = vsyncpa %s270, 1

</llo_original>
